<compile_context>
chip_gen: v5e
topology: v5e:2x2
jax: 0.10.0
libtpu: 0.0.40
codegen_flags: <defaults>
</compile_context>

<pallas_src>
import jax
import jax.numpy as jnp
from jax import lax
from jax.experimental import pallas as pl
from jax.experimental.pallas import tpu as pltpu


def _linear_kernel(x_ref, w_ref, b_ref, o_ref):
    # x: (TB, D_in), w: (D_out, D_in) [PyTorch layout], b: (1, D_out).
    # Contract x's dim 1 against w's dim 1 -> (TB, D_out); f32 MXU accumulation.
    acc = lax.dot_general(
        x_ref[...], w_ref[...],
        dimension_numbers=(((1,), (1,)), ((), ())),
        preferred_element_type=jnp.float32,
    )
    o_ref[...] = (acc + b_ref[...]).astype(o_ref.dtype)


def head_measure_encoder(head_anthro, weight, bias, *, batch_tile=1024):
    """head_anthro: (B, D_in); weight: (D_out, D_in) (PyTorch layout); bias: (D_out,)."""
    B, d_in = head_anthro.shape
    d_out, d_in_w = weight.shape
    assert d_in_w == d_in, "weight must be (head_emb_dim, head_anthro_dim)"
    assert bias.shape == (d_out,)

    b2 = bias.reshape(1, d_out)  # keep 2D for TPU vreg layout
    out_shape = jax.ShapeDtypeStruct((B, d_out), head_anthro.dtype)

    if B <= batch_tile:
        # Small batch: everything fits in VMEM. No grid, no pipeline machinery,
        # no double buffers — kernel body runs exactly once.
        return pl.pallas_call(
            _linear_kernel,
            out_shape=out_shape,
            in_specs=[
                pl.BlockSpec(memory_space=pltpu.MemorySpace.VMEM),  # x
                pl.BlockSpec(memory_space=pltpu.MemorySpace.VMEM),  # W (D_out, D_in)
                pl.BlockSpec(memory_space=pltpu.MemorySpace.VMEM),  # b (1, D_out)
            ],
            out_specs=pl.BlockSpec(memory_space=pltpu.MemorySpace.VMEM),
        )(head_anthro, weight, b2)

    # Large batch: tile over B only (mem-bound regime); W and b (<3 KiB) stay resident.
    grid = (pl.cdiv(B, batch_tile),)
    return pl.pallas_call(
        _linear_kernel,
        out_shape=out_shape,
        grid_spec=pl.GridSpec(
            grid=grid,
            in_specs=[
                pl.BlockSpec((batch_tile, d_in), lambda i: (i, 0)),
                pl.BlockSpec((d_out, d_in), lambda i: (0, 0)),
                pl.BlockSpec((1, d_out), lambda i: (0, 0)),
            ],
            out_specs=pl.BlockSpec((batch_tile, d_out), lambda i: (i, 0)),
        ),
        compiler_params=pltpu.CompilerParams(
            dimension_semantics=("parallel",)),  # lets Mosaic shard batch across TCs (v7x)
    )(head_anthro, weight, b2)


if __name__ == "__main__":
    # Small shapes consistent with the module: batch=2, head_anthro_dim=16, head_emb_dim=32
    B, head_anthro_dim, head_emb_dim = 2, 16, 32

    key = jax.random.PRNGKey(0)
    k_x, k_w, k_b = jax.random.split(key, 3)

    # Deterministic synthetic parameters (nn.Linear shapes: W (out, in), b (out,))
    bound = 1.0 / (head_anthro_dim ** 0.5)
    weight = jax.random.uniform(k_w, (head_emb_dim, head_anthro_dim),
                                dtype=jnp.float32, minval=-bound, maxval=bound)
    bias = jax.random.uniform(k_b, (head_emb_dim,),
                              dtype=jnp.float32, minval=-bound, maxval=bound)

    head_anthro = jax.random.normal(k_x, (B, head_anthro_dim), dtype=jnp.float32)

    out = head_measure_encoder(head_anthro, weight, bias)
    out = jax.block_until_ready(out)

    # Correctness check against plain-JAX reference of the PyTorch forward.
    ref = head_anthro @ weight.T + bias
    assert out.shape == (B, head_emb_dim)
    assert jnp.allclose(out, ref, atol=1e-5, rtol=1e-5), "mismatch vs reference"

    print("KERNEL_OK")
</pallas_src>

<mosaic_0001>
module attributes {stable_mosaic.version = 11 : i64} {
  func.func @_linear_kernel(%arg0: memref<2x16xf32, #tpu.memory_space<vmem>>, %arg1: memref<32x16xf32, #tpu.memory_space<vmem>>, %arg2: memref<1x32xf32, #tpu.memory_space<vmem>>, %arg3: memref<2x32xf32, #tpu.memory_space<vmem>>) attributes {dimension_semantics = [], scalar_prefetch = 0 : i64, scratch_operands = 0 : i64, tpu.core_type = #tpu.core_type<tc>} {
    %c0 = arith.constant 0 : index
    %c0_0 = arith.constant 0 : index
    %0 = vector.load %arg0[%c0, %c0_0] : memref<2x16xf32, #tpu.memory_space<vmem>>, vector<2x16xf32>
    %c0_1 = arith.constant 0 : index
    %c0_2 = arith.constant 0 : index
    %1 = vector.load %arg1[%c0_1, %c0_2] : memref<32x16xf32, #tpu.memory_space<vmem>>, vector<32x16xf32>
    %cst = arith.constant dense<0.000000e+00> : vector<2x32xf32>
    %2 = tpu.matmul %0, %1, %cst {dimension_numbers = #tpu.dot_dimension_numbers<[1], [1], [0], [0], [0, 0, 1, 0], [], []>} : vector<2x16xf32>, vector<32x16xf32>, vector<2x32xf32> -> vector<2x32xf32>
    %c0_3 = arith.constant 0 : index
    %c0_4 = arith.constant 0 : index
    %3 = vector.load %arg2[%c0_3, %c0_4] : memref<1x32xf32, #tpu.memory_space<vmem>>, vector<1x32xf32>
    %4 = vector.broadcast %3 : vector<1x32xf32> to vector<2x32xf32>
    %5 = arith.addf %2, %4 : vector<2x32xf32>
    %c0_5 = arith.constant 0 : index
    %c0_6 = arith.constant 0 : index
    %6 = vector.load %arg3[%c0_5, %c0_6] : memref<2x32xf32, #tpu.memory_space<vmem>>, vector<2x32xf32>
    tpu.vector_store %arg3[%c0_5, %c0_6], %5 {strides = array<i32>} : memref<2x32xf32, #tpu.memory_space<vmem>>, vector<2x32xf32>,
    return
  }
}

</mosaic_0001>

<llo_original>
// kernel: tpu_custom_call.1
$region0: #{tpu_custom_call.1}
  #allocation0 [shape = 'u32[]', space=smem, size = 0x4, offset = 0x4, fixed_abs, tag = 'smem constant byte address 0x4 - core index']
  #allocation1 [shape = 'u32[72,128]{1,0:T(1,128)}', space=vmem, size = 0x9000, scoped, tag = 'internal scratch']
  %s0 = inlined_call_operand.vmem [shape: f32[2,16], index: 0, kind: input, shape index: {}]
  %s1 = inlined_call_operand.vmem [shape: f32[32,16], index: 1, kind: input, shape index: {}]
  %s2 = inlined_call_operand.vmem [shape: f32[1,32], index: 2, kind: input, shape index: {}]
  %s3 = inlined_call_operand.hbm [shape: f32[2,32], index: 3, kind: output, shape index: {}]
  %s4 = sld [smem:[#allocation0]]
  $region22: #{tpu_custom_call.1} parent=0
    _
  %s6 = ssub.s32 1, %s4
  %s7 = scalar_select 0, %s6, %s4
  $region1: #{tpu_custom_call.1} parent=0
    #allocation2 [shape = 'u8[1024]{0}', space=vmem, size = 0x400, scoped, tag = 'output window, operand 0, single buffered']
    #allocation3 [shape = 's32[1]{0}', space=sflag, size = 0x4, scoped, tag = 'scoped memory for tpu_custom_call.1']
    %8 = vsyncpa [#allocation3], 0
    // Predicated region
    $region2: #{tpu_custom_call.1} parent=1 // pred_check
      _
    $region3: #{tpu_custom_call.1} parent=1 // pred_check_branch
      %10 = sbr.rel (0) target = $region5
    $region4: #{tpu_custom_call.1} parent=1 // pred_region
      _
    $region5: #{tpu_custom_call.1} parent=1 // pred_fallthru
      _
    // Predicated region
    $region6: #{tpu_custom_call.1} parent=1 // pred_check
      _
    $region7: #{tpu_custom_call.1} parent=1 // pred_check_branch
      %12 = sbr.rel (0) target = $region9
    $region8: #{tpu_custom_call.1} parent=1 // pred_region
      _
    $region9: #{tpu_custom_call.1} parent=1 // pred_fallthru
      _
    // Predicated region
    $region10: #{tpu_custom_call.1} parent=1 // pred_check
      _
    $region11: #{tpu_custom_call.1} parent=1 // pred_check_branch
      %14 = sbr.rel (0) target = $region13
    $region12: #{tpu_custom_call.1} parent=1 // pred_region
      _
    $region13: #{tpu_custom_call.1} parent=1 // pred_fallthru
      _
    %v15 = vld [vmem:[%s0] sm:$0x3]
    %v16 = vld [vmem:[%s1] sm:$0xff]
    %v17 = vld [vmem:[%s1 + $0x8] sm:$0xff]
    %v18 = vld [vmem:[%s1 + $0x10] sm:$0xff]
    %v19 = vld [vmem:[%s1 + $0x18] sm:$0xff]
    %v20 = vld [vmem:[%s2] sm:$0x1]
    %v22 = vperm.slane %v20, 0
    %vm24 = vcmask 130048
    %v26 = vsel %vm24, %v15, 0
    %v29 = vsel %vm24, %v16, 0
    %v32 = vsel %vm24, %v17, 0
    %v35 = vsel %vm24, %v18, 0
    %v38 = vsel %vm24, %v19, 0
    %40 = vmatpush.xpose.msra.mxu0 0.0
    %41 = vmatpush.xpose.msra.mxu0 0.0
    %42 = vmatpush.xpose.msra.mxu0 0.0
    %43 = vmatpush.xpose.msra.mxu0 0.0
    %44 = vmatpush.xpose.msra.mxu0 0.0
    %45 = vmatpush.xpose.msra.mxu0 0.0
    %46 = vmatpush.xpose.msra.mxu0 0.0
    %47 = vmatpush.xpose.msra.mxu0 0.0
    %48 = vmatpush.xpose.msra.mxu0 0.0
    %49 = vmatpush.xpose.msra.mxu0 0.0
    %50 = vmatpush.xpose.msra.mxu0 0.0
    %51 = vmatpush.xpose.msra.mxu0 0.0
    %52 = vmatpush.xpose.msra.mxu0 %v38
    %53 = vmatpush.xpose.msra.mxu0 %v35
    %54 = vmatpush.xpose.msra.mxu0 %v32
    %55 = vmatpush.xpose.msra.mxu0 %v29
    %56 = vmatmul.f32.gmra.mxu0 %v26
    %v57 = vpop.f32.mrf.mxu0
    %v58 = vadd.f32 %v22, %v57
    %59 = vdwg.mxu0
    %vm60 = vcmask 254976
    %61 = vst.msk [vmem:[#allocation2] sm:$0x3] %vm60, %v58
    // Predicated region
    $region14: #{tpu_custom_call.1} parent=1 // pred_check
      _
    $region15: #{tpu_custom_call.1} parent=1 // pred_check_branch
      %63 = sbr.rel (0) target = $region17
    $region16: #{tpu_custom_call.1} parent=1 // pred_region
      %65 = vsyncadd [#allocation3], 0
      %s67 = sshll.u32 [#allocation2], 4
      %s68 = int_to_ptr.vmem [resolvable:$true] %s67
      %s69 = sshll.u32 %s3, 4
      %s70 = int_to_ptr.hbm [resolvable:$true] %s69
      %72 = dma.vmem_to_hbm [thread:$0]  %s68, 32, %s70, [#allocation3]
    $region17: #{tpu_custom_call.1} parent=1 // pred_fallthru
      _
    // Predicated region
    $region18: #{tpu_custom_call.1} parent=1 // pred_check
      _
    $region19: #{tpu_custom_call.1} parent=1 // pred_check_branch
      %74 = sbr.rel (0) target = $region21
    $region20: #{tpu_custom_call.1} parent=1 // pred_region
      %76 = dma.done [#allocation3], 32
    $region21: #{tpu_custom_call.1} parent=1 // pred_fallthru
      _
    %77 = vsyncpa [#allocation3], 1

</llo_original>
